<compile_context>
chip_gen: v7x
topology: tpu7x:2x2x1
jax: 0.10.0
libtpu: 0.0.40
codegen_flags: <defaults>
</compile_context>

<pallas_src>
import functools

import jax
import jax.numpy as jnp
from jax.experimental import pallas as pl
from jax.experimental.pallas import tpu as pltpu


def _adaln_kernel(x_ref, alpha_ref, beta_ref, o_ref, *, eps: float, hidden_dim: int):
    # x_ref:     (TS, H) tile (one sequence chunk of one batch element)
    # alpha_ref: (1, H)  row vector (broadcast over the tile's rows)
    # beta_ref:  (1, H)  row vector
    x = x_ref[...].astype(jnp.float32)

    mean = jnp.mean(x, axis=-1, keepdims=True)            # (TS, 1)
    centered = x - mean
    # torch.std default is the unbiased estimator (divide by N - 1).  The
    # centered two-pass form is kept for numerical safety (vs. sum(x*x)).
    var = jnp.sum(centered * centered, axis=-1, keepdims=True) / (hidden_dim - 1)

    # One reciprocal per row (EUP slot) instead of a full-tile divide (VPU).
    # Exact (approx=False) to preserve the ~1e-5 accuracy of the reference.
    inv = pl.reciprocal(jnp.sqrt(var) + eps)               # (TS, 1)

    alpha = alpha_ref[...].astype(jnp.float32)             # (1, H)
    beta = beta_ref[...].astype(jnp.float32)               # (1, H)
    # Let the VPU broadcast the (TS,1) and (1,H) operands; never materialize
    # explicit (TS,H) copies of alpha/beta.
    o_ref[...] = (alpha * (centered * inv) + beta).astype(o_ref.dtype)


def _sublane_multiple(dtype) -> int:
    """Sublane granularity: 8 rows for 32-bit, 16 for bf16, 32 for 8-bit dtypes."""
    itemsize = jnp.dtype(dtype).itemsize
    return max(8, 32 // max(itemsize, 1))


def _physical_vmem_bytes() -> int:
    """Best-effort query of this chip's VMEM capacity (falls back to v7x's 64 MiB)."""
    try:
        info = pltpu.get_tpu_info()
        cap = int(getattr(info, "vmem_capacity_bytes", 0))
        if cap > 0:
            return cap
    except Exception:
        pass
    return 64 << 20  # conservative: v7x per-TC VMEM; v5e/v6e have 128 MiB


def _pick_seq_tile(B: int, S: int, H: int, dtype,
                   target_bytes: int = 4 << 20) -> int:
    """Pick a sequence-tile size: ~target_bytes of f32 per tile, dtype-aware
    sublane multiple, divisor of S when possible, and >= ~8 total grid steps."""
    sub = _sublane_multiple(dtype)
    bytes_per_row = max(H * 4, 1)            # kernel upcasts to f32
    rows = max(sub, target_bytes // bytes_per_row)
    rows = max(sub, (rows // sub) * sub)
    if rows >= S:
        return S                             # full extent is always legal

    # Keep enough grid steps to feed both v7x TensorCores and the pipeline.
    min_steps = 8
    while B * (-(-S // rows)) < min_steps and rows > sub:
        rows = max(sub, ((rows // 2) // sub) * sub)

    # Prefer a divisor of S near the target so there is no tiny remainder tile.
    for cand in range(rows, sub - 1, -sub):
        if S % cand == 0:
            return cand
    return rows


def adaptive_layer_norm(x: jax.Array, alpha: jax.Array, beta: jax.Array,
                        eps: float = 1e-6, seq_tile: int | None = None) -> jax.Array:
    """x: (B, S, H); alpha, beta: (B, 1, H). Returns (B, S, H)."""
    B, S, H = x.shape
    assert alpha.shape == (B, 1, H) and beta.shape == (B, 1, H)
    assert H >= 2, "unbiased std (ddof=1) is undefined for hidden_dim < 2"

    sub = _sublane_multiple(x.dtype)
    if seq_tile is None:
        seq_tile = _pick_seq_tile(B, S, H, x.dtype)
    else:
        seq_tile = min(int(seq_tile), S)
        if seq_tile < S:
            seq_tile = max(sub, (seq_tile // sub) * sub)
            seq_tile = min(seq_tile, S)

    grid = (B, pl.cdiv(S, seq_tile))
    kernel = functools.partial(_adaln_kernel, eps=eps, hidden_dim=H)

    # Sequence-tile axis innermost: alpha/beta block index is constant across
    # consecutive grid steps, so Pallas skips re-DMAing them.
    x_spec = pl.BlockSpec((pl.Squeezed(), seq_tile, H), lambda b, s: (b, s, 0))
    ab_spec = pl.BlockSpec((pl.Squeezed(), 1, H), lambda b, s: (b, 0, 0))
    out_spec = pl.BlockSpec((pl.Squeezed(), seq_tile, H), lambda b, s: (b, s, 0))

    # Derive the VMEM limit from the chosen tile: 2x double-buffered input,
    # 2x double-buffered output, ~4 f32 tile-sized temporaries, + headroom;
    # capped below physical VMEM (leaving room for internal compiler scratch).
    itemsize = jnp.dtype(x.dtype).itemsize
    blk_io = seq_tile * H * itemsize
    blk_f32 = seq_tile * H * 4
    need = 4 * blk_io + 4 * blk_f32 + (8 << 20)
    cap = max(_physical_vmem_bytes() - (16 << 20), 32 << 20)
    vmem_limit = int(min(max(need, 32 << 20), cap))

    return pl.pallas_call(
        kernel,
        out_shape=jax.ShapeDtypeStruct((B, S, H), x.dtype),
        grid_spec=pltpu.PrefetchScalarGridSpec(
            num_scalar_prefetch=0,
            grid=grid,
            in_specs=[x_spec, ab_spec, ab_spec],
            out_specs=out_spec,
        ),
        compiler_params=pltpu.CompilerParams(
            dimension_semantics=("parallel", "parallel"),
            vmem_limit_bytes=vmem_limit,
        ),
    )(x, alpha, beta)


def _reference(x, alpha, beta, eps=1e-6):
    x32 = x.astype(jnp.float32)
    mean = jnp.mean(x32, axis=-1, keepdims=True)
    var = jnp.var(x32, axis=-1, keepdims=True, ddof=1)   # unbiased, like torch.std
    std = jnp.sqrt(var)
    return alpha.astype(jnp.float32) * (x32 - mean) / (std + eps) + beta.astype(jnp.float32)


if __name__ == "__main__":
    key = jax.random.PRNGKey(0)

    # --- small shape consistent with the module (B=2, S=8, H=32) ---
    B, S, H = 2, 8, 32
    kx, ka, kb, key = jax.random.split(key, 4)
    x = jax.random.normal(kx, (B, S, H), dtype=jnp.float32)
    alpha = 1.0 + 0.1 * jax.random.normal(ka, (B, 1, H), dtype=jnp.float32)
    beta = 0.1 * jax.random.normal(kb, (B, 1, H), dtype=jnp.float32)

    out = adaptive_layer_norm(x, alpha, beta, eps=1e-6)
    out = jax.block_until_ready(out)
    ref = _reference(x, alpha, beta, eps=1e-6)
    assert out.shape == (B, S, H)
    assert jnp.allclose(out, ref, atol=1e-5, rtol=1e-5), "mismatch vs reference (small)"

    # --- exercise the multi-tile (B, S_tiles) grid path with an explicit tile ---
    B2, S2, H2 = 2, 64, 128
    kx2, ka2, kb2, key = jax.random.split(key, 4)
    x2 = jax.random.normal(kx2, (B2, S2, H2), dtype=jnp.float32)
    alpha2 = 1.0 + 0.1 * jax.random.normal(ka2, (B2, 1, H2), dtype=jnp.float32)
    beta2 = 0.1 * jax.random.normal(kb2, (B2, 1, H2), dtype=jnp.float32)

    out2 = adaptive_layer_norm(x2, alpha2, beta2, eps=1e-6, seq_tile=16)  # grid (2, 4)
    out2 = jax.block_until_ready(out2)
    ref2 = _reference(x2, alpha2, beta2, eps=1e-6)
    assert jnp.allclose(out2, ref2, atol=1e-5, rtol=1e-5), "mismatch vs reference (tiled)"

    # --- bf16 path (dtype-aware sublane rounding, auto tile picker) ---
    B3, S3, H3 = 2, 32, 128
    kx3, ka3, kb3, key = jax.random.split(key, 4)
    x3 = jax.random.normal(kx3, (B3, S3, H3), dtype=jnp.float32).astype(jnp.bfloat16)
    alpha3 = (1.0 + 0.1 * jax.random.normal(ka3, (B3, 1, H3), jnp.float32)).astype(jnp.bfloat16)
    beta3 = (0.1 * jax.random.normal(kb3, (B3, 1, H3), jnp.float32)).astype(jnp.bfloat16)

    out3 = adaptive_layer_norm(x3, alpha3, beta3, eps=1e-6)
    out3 = jax.block_until_ready(out3)
    ref3 = _reference(x3, alpha3, beta3, eps=1e-6)
    assert jnp.allclose(out3.astype(jnp.float32), ref3, atol=5e-2), "mismatch vs reference (bf16)"

    print("KERNEL_OK")
</pallas_src>

<mosaic_0001>
module attributes {stable_mosaic.version = 11 : i64} {
  func.func @_adaln_kernel(%arg0: i32, %arg1: i32, %arg2: memref<1x8x32xf32, #tpu.memory_space<vmem>>, %arg3: memref<1x1x32xf32, #tpu.memory_space<vmem>>, %arg4: memref<1x1x32xf32, #tpu.memory_space<vmem>>, %arg5: memref<1x8x32xf32, #tpu.memory_space<vmem>>) attributes {dimension_semantics = [#tpu.dimension_semantics<parallel>, #tpu.dimension_semantics<parallel>], iteration_bounds = array<i64: 2, 1>, scalar_prefetch = 0 : i64, scratch_operands = 0 : i64, tpu.core_type = #tpu.core_type<tc>, window_params = [{transform_indices = @transform_0, window_bounds = array<i64: 1, 8, 32>}, {transform_indices = @transform_1, window_bounds = array<i64: 1, 1, 32>}, {transform_indices = @transform_2, window_bounds = array<i64: 1, 1, 32>}, {transform_indices = @transform_3, window_bounds = array<i64: 1, 8, 32>}]} {
    %c0 = arith.constant 0 : index
    %c0_0 = arith.constant 0 : index
    %c0_1 = arith.constant 0 : index
    %0 = vector.load %arg2[%c0, %c0_0, %c0_1] : memref<1x8x32xf32, #tpu.memory_space<vmem>>, vector<1x8x32xf32>
    %1 = vector.shape_cast %0 : vector<1x8x32xf32> to vector<8x32xf32>
    %cst = arith.constant dense<0.000000e+00> : vector<8xf32>
    %2 = vector.multi_reduction <add>, %1, %cst [1] : vector<8x32xf32> to vector<8xf32>
    %3 = vector.shape_cast %2 : vector<8xf32> to vector<8x1xf32>
    %cst_2 = arith.constant 3.200000e+01 : f32
    %4 = vector.broadcast %cst_2 : f32 to vector<8x1xf32>
    %5 = arith.divf %3, %4 : vector<8x1xf32>
    %6 = vector.broadcast %5 : vector<8x1xf32> to vector<8x32xf32>
    %7 = arith.subf %1, %6 : vector<8x32xf32>
    %8 = arith.mulf %7, %7 : vector<8x32xf32>
    %cst_3 = arith.constant dense<0.000000e+00> : vector<8xf32>
    %9 = vector.multi_reduction <add>, %8, %cst_3 [1] : vector<8x32xf32> to vector<8xf32>
    %10 = vector.shape_cast %9 : vector<8xf32> to vector<8x1xf32>
    %cst_4 = arith.constant 3.100000e+01 : f32
    %11 = vector.broadcast %cst_4 : f32 to vector<8x1xf32>
    %12 = arith.divf %10, %11 : vector<8x1xf32>
    %13 = math.sqrt %12 : vector<8x1xf32>
    %cst_5 = arith.constant 9.99999997E-7 : f32
    %14 = vector.broadcast %cst_5 : f32 to vector<8x1xf32>
    %15 = arith.addf %13, %14 : vector<8x1xf32>
    %16 = tpu.reciprocal %15 : vector<8x1xf32> -> vector<8x1xf32>
    %c0_6 = arith.constant 0 : index
    %c0_7 = arith.constant 0 : index
    %c0_8 = arith.constant 0 : index
    %17 = vector.load %arg3[%c0_6, %c0_7, %c0_8] : memref<1x1x32xf32, #tpu.memory_space<vmem>>, vector<1x1x32xf32>
    %18 = vector.shape_cast %17 : vector<1x1x32xf32> to vector<1x32xf32>
    %c0_9 = arith.constant 0 : index
    %c0_10 = arith.constant 0 : index
    %c0_11 = arith.constant 0 : index
    %19 = vector.load %arg4[%c0_9, %c0_10, %c0_11] : memref<1x1x32xf32, #tpu.memory_space<vmem>>, vector<1x1x32xf32>
    %20 = vector.shape_cast %19 : vector<1x1x32xf32> to vector<1x32xf32>
    %21 = vector.broadcast %16 : vector<8x1xf32> to vector<8x32xf32>
    %22 = arith.mulf %7, %21 : vector<8x32xf32>
    %23 = vector.broadcast %18 : vector<1x32xf32> to vector<8x32xf32>
    %24 = arith.mulf %23, %22 : vector<8x32xf32>
    %25 = vector.broadcast %20 : vector<1x32xf32> to vector<8x32xf32>
    %26 = arith.addf %24, %25 : vector<8x32xf32>
    %c0_12 = arith.constant 0 : index
    %c0_13 = arith.constant 0 : index
    %c0_14 = arith.constant 0 : index
    %27 = vector.load %arg5[%c0_12, %c0_13, %c0_14] : memref<1x8x32xf32, #tpu.memory_space<vmem>>, vector<1x8x32xf32>
    %28 = vector.shape_cast %27 : vector<1x8x32xf32> to vector<8x32xf32>
    %29 = vector.shape_cast %26 : vector<8x32xf32> to vector<1x8x32xf32>
    tpu.vector_store %arg5[%c0_12, %c0_13, %c0_14], %29 {strides = array<i32>} : memref<1x8x32xf32, #tpu.memory_space<vmem>>, vector<1x8x32xf32>,
    return
  }
  func.func @transform_0(%arg0: i32, %arg1: i32) -> (i32, i32, i32) {
    %c0_i32 = arith.constant 0 : i32
    %c0_i32_0 = arith.constant 0 : i32
    return %arg0, %arg1, %c0_i32 : i32, i32, i32
  }
  func.func @transform_1(%arg0: i32, %arg1: i32) -> (i32, i32, i32) {
    %c0_i32 = arith.constant 0 : i32
    %c0_i32_0 = arith.constant 0 : i32
    %c0_i32_1 = arith.constant 0 : i32
    return %arg0, %c0_i32, %c0_i32_0 : i32, i32, i32
  }
  func.func @transform_2(%arg0: i32, %arg1: i32) -> (i32, i32, i32) {
    %c0_i32 = arith.constant 0 : i32
    %c0_i32_0 = arith.constant 0 : i32
    %c0_i32_1 = arith.constant 0 : i32
    return %arg0, %c0_i32, %c0_i32_0 : i32, i32, i32
  }
  func.func @transform_3(%arg0: i32, %arg1: i32) -> (i32, i32, i32) {
    %c0_i32 = arith.constant 0 : i32
    %c0_i32_0 = arith.constant 0 : i32
    return %arg0, %arg1, %c0_i32 : i32, i32, i32
  }
}

</mosaic_0001>

<llo_original>
// kernel: tpu_custom_call.1
$region0: #{tpu_custom_call.1}
  #allocation0 [shape = 'u32[]', space=smem, size = 0x4, offset = 0x4, fixed_abs, tag = 'smem constant byte address 0x4 - core index']
  #allocation1 [shape = 'u32[144,128]{1,0:T(1,128)}', space=vmem, size = 0x12000, scoped, tag = 'internal scratch']
  %s0 = inlined_call_operand.hbm [shape: f32[2,8,32], index: 0, kind: input, shape index: {}]
  %s1 = inlined_call_operand.vmem [shape: f32[2,1,32], index: 1, kind: input, shape index: {}]
  %s2 = inlined_call_operand.vmem [shape: f32[2,1,32], index: 2, kind: input, shape index: {}]
  %s3 = inlined_call_operand.hbm [shape: f32[2,8,32], index: 3, kind: output, shape index: {}]
  %s4 = sld [smem:[#allocation0]]
  $region49: #{tpu_custom_call.1} parent=0
    _
  %s6 = ssub.s32 1, %s4
  %s7 = scalar_select 0, %s6, %s4
  $region1: #{tpu_custom_call.1} parent=0
    #allocation2 [shape = 'u8[8192]{0}', space=vmem, size = 0x2000, scoped, tag = 'input window, operand 0']
    #allocation3 [shape = 's32[2]{0}', space=sflag, size = 0x8, scoped, tag = 'scoped memory for tpu_custom_call.1']
    #allocation4 [shape = 's32[2]{0}', space=sflag, size = 0x8, scoped, tag = 'scoped memory for tpu_custom_call.1']
    #allocation5 [shape = 'u8[8192]{0}', space=vmem, size = 0x2000, scoped, tag = 'output window, operand 0']
    %8 = vsyncpa [#allocation3], 0
    %s9 = scalar_lea.sflag [#allocation3], 1
    %10 = vsyncpa %s9, 0
    %11 = vsyncpa [#allocation4], 0
    %s12 = scalar_lea.sflag [#allocation4], 1
    %13 = vsyncpa %s12, 0
    loop: start=0, step=1, limit=4
    $region2: #{tpu_custom_call.1} parent=1 // loop_pre_header
      _
    $region3: #{tpu_custom_call.1} parent=1 // loop_header
      %s15 = sphi 0, %s19
      %p16 = scmp.ge.s32.totalorder %s15, 4
      %s22 = sphi 0, %s34
      %s23 = sphi 0, %s30
      %s24 = sphi 0, %s22
      %s25 = sphi 0, %s23
      %s26 = sphi 0, %s24
      %s27 = sphi 0, %s25
      %s39 = sphi 0, %s41
      %s42 = sphi 0, %s39
      %s43 = sphi 0, %s42
      %s59 = sphi 0, %s43
      %s65 = sphi 0, %s67
      %s68 = sphi 0, %s65
      %s69 = sphi 0, %s68
      %s85 = sphi 0, %s69
      %s91 = sphi 0, %s93
      %s94 = sphi 0, %s91
      %s95 = sphi 0, %s94
      %s111 = sphi 0, %s95
      %s119 = sphi 0, %s121
      %s122 = sphi 0, %s119
      %s123 = sphi 0, %s122
      %s139 = sphi 0, %s123
    $region4: #{tpu_custom_call.1} parent=1 // loop_header_branch
      %18 = sbr.rel (%p16) target = $region8
    $region5: #{tpu_custom_call.1} parent=1 // loop_body
      %s20 = ssub.s32 %s15, 1
      %s21 = ssub.s32 %s15, 2
      %s28 = sadd.s32 1, %s23
      %p29 = scmp.ge.s32.totalorder %s28, 1
      %s30 = scalar_select %p29, 0, %s28
      %s31 = sadd.s32 1, %s22
      %s32 = scalar_select %p29, %s31, %s22
      %p33 = scmp.ge.s32.totalorder %s32, 2
      %s34 = scalar_select %p33, 0, %s32
      %s35 = ssub.s32 %s22, %s34
      %s36 = ssub.s32 %s23, %s30
      %s37 = sor.u32 %s35, %s36
      %p38 = scmp.eq.s32.totalorder %s37, 0
      %s40 = sadd.s32 %s39, 1
      %s41 = scalar_select %p38, %s39, %s40
      %p44 = pneg %p38
      %p45 = scmp.eq.s32.totalorder %s15, 1
      %p46 = por %p44, %p45
      %p47 = scmp.ne.s32.totalorder %s39, %s42
      %p48 = scmp.eq.s32.totalorder %s15, 0
      %p49 = por %p47, %p48
      %p50 = scmp.ne.s32.totalorder %s39, %s42
      %p51 = scmp.eq.s32.totalorder %s20, 1
      %p52 = por %p50, %p51
      %p53 = scmp.ne.s32.totalorder %s42, %s43
      %p54 = scmp.eq.s32.totalorder %s20, 0
      %p55 = por %p53, %p54
      %p56 = scmp.ne.s32.totalorder %s42, %s43
      %p57 = scmp.eq.s32.totalorder %s21, 1
      %p58 = por %p56, %p57
      %p60 = scmp.ne.s32.totalorder %s43, %s59
      %p61 = scmp.eq.s32.totalorder %s21, 0
      %p62 = por %p60, %p61
      %s63 = ssub.s32 %s22, %s34
      %p64 = scmp.eq.s32.totalorder %s63, 0
      %s66 = sadd.s32 %s65, 1
      %s67 = scalar_select %p64, %s65, %s66
      %p70 = pneg %p64
      %p71 = scmp.eq.s32.totalorder %s15, 1
      %p72 = por %p70, %p71
      %p73 = scmp.ne.s32.totalorder %s65, %s68
      %p74 = scmp.eq.s32.totalorder %s15, 0
      %p75 = por %p73, %p74
      %p76 = scmp.ne.s32.totalorder %s65, %s68
      %p77 = scmp.eq.s32.totalorder %s20, 1
      %p78 = por %p76, %p77
      %p79 = scmp.ne.s32.totalorder %s68, %s69
      %p80 = scmp.eq.s32.totalorder %s20, 0
      %p81 = por %p79, %p80
      %p82 = scmp.ne.s32.totalorder %s68, %s69
      %p83 = scmp.eq.s32.totalorder %s21, 1
      %p84 = por %p82, %p83
      %p86 = scmp.ne.s32.totalorder %s69, %s85
      %p87 = scmp.eq.s32.totalorder %s21, 0
      %p88 = por %p86, %p87
      %s89 = ssub.s32 %s22, %s34
      %p90 = scmp.eq.s32.totalorder %s89, 0
      %s92 = sadd.s32 %s91, 1
      %s93 = scalar_select %p90, %s91, %s92
      %p96 = pneg %p90
      %p97 = scmp.eq.s32.totalorder %s15, 1
      %p98 = por %p96, %p97
      %p99 = scmp.ne.s32.totalorder %s91, %s94
      %p100 = scmp.eq.s32.totalorder %s15, 0
      %p101 = por %p99, %p100
      %p102 = scmp.ne.s32.totalorder %s91, %s94
      %p103 = scmp.eq.s32.totalorder %s20, 1
      %p104 = por %p102, %p103
      %p105 = scmp.ne.s32.totalorder %s94, %s95
      %p106 = scmp.eq.s32.totalorder %s20, 0
      %p107 = por %p105, %p106
      %p108 = scmp.ne.s32.totalorder %s94, %s95
      %p109 = scmp.eq.s32.totalorder %s21, 1
      %p110 = por %p108, %p109
      %p112 = scmp.ne.s32.totalorder %s95, %s111
      %p113 = scmp.eq.s32.totalorder %s21, 0
      %p114 = por %p112, %p113
      %s115 = ssub.s32 %s22, %s34
      %s116 = ssub.s32 %s23, %s30
      %s117 = sor.u32 %s115, %s116
      %p118 = scmp.eq.s32.totalorder %s117, 0
      %s120 = sadd.s32 %s119, 1
      %s121 = scalar_select %p118, %s119, %s120
      %p124 = pneg %p118
      %p125 = scmp.eq.s32.totalorder %s15, 1
      %p126 = por %p124, %p125
      %p127 = scmp.ne.s32.totalorder %s119, %s122
      %p128 = scmp.eq.s32.totalorder %s15, 0
      %p129 = por %p127, %p128
      %p130 = scmp.ne.s32.totalorder %s119, %s122
      %p131 = scmp.eq.s32.totalorder %s20, 1
      %p132 = por %p130, %p131
      %p133 = scmp.ne.s32.totalorder %s122, %s123
      %p134 = scmp.eq.s32.totalorder %s20, 0
      %p135 = por %p133, %p134
      %p136 = scmp.ne.s32.totalorder %s122, %s123
      %p137 = scmp.eq.s32.totalorder %s21, 1
      %p138 = por %p136, %p137
      %p140 = scmp.ne.s32.totalorder %s123, %s139
      %p141 = scmp.eq.s32.totalorder %s21, 0
      %p142 = por %p140, %p141
      %p143 = scmp.le.s32.totalorder 1, %s15
      %p144 = scmp.lt.s32.totalorder %s15, 3
      %p145 = pnand %p143, %p144
      %p146 = pneg %p145
      // Predicated region
      $region9: #{tpu_custom_call.1} parent=5 // pred_check
        _
      $region10: #{tpu_custom_call.1} parent=5 // pred_check_branch
        %148 = sbr.rel (%p145) target = $region12
      $region11: #{tpu_custom_call.1} parent=5 // pred_region
        %s149 = ssub.s32 %s15, 1
      $region12: #{tpu_custom_call.1} parent=5 // pred_fallthru
        _
      %p150 = scmp.lt.s32.totalorder %s15, 2
      // Predicated region
      $region13: #{tpu_custom_call.1} parent=5 // pred_check
        %p151 = pneg %p150
      $region14: #{tpu_custom_call.1} parent=5 // pred_check_branch
        %153 = sbr.rel (%p151) target = $region16
      $region15: #{tpu_custom_call.1} parent=5 // pred_region
        // Predicated region
        $region17: #{tpu_custom_call.1} parent=15 // pred_check
          %p154 = pneg %p49
        $region18: #{tpu_custom_call.1} parent=15 // pred_check_branch
          %156 = sbr.rel (%p154) target = $region20
        $region19: #{tpu_custom_call.1} parent=15 // pred_region
          %s157 = sand.u32 %s39, 1
          %s158 = scalar_lea.sflag [#allocation3], %s157
          %s159 = sand.u32 %s39, 1
          %s160 = smul.addr %s159, 8
          %s161 = scalar_lea.vmem [#allocation2], %s160
          %s163 = ssub.s32 128, 128
          %164 = vsyncadd %s158, %s163
          %s165 = sadd.s32 %s23, %s22
          %s166 = smul.addr %s165, 128
          %s167 = scalar_lea.hbm %s0, %s166
          %s169 = sshll.u32 %s161, 4
          %s170 = int_to_ptr.vmem [resolvable:$true] %s169
          %172 = dma.hbm_to_vmem [thread:$0]  %s167, 128, %s170, %s158
        $region20: #{tpu_custom_call.1} parent=15 // pred_fallthru
          _
        // Predicated region
        $region21: #{tpu_custom_call.1} parent=15 // pred_check
          %p173 = pneg %p75
        $region22: #{tpu_custom_call.1} parent=15 // pred_check_branch
          %175 = sbr.rel (%p173) target = $region24
        $region23: #{tpu_custom_call.1} parent=15 // pred_region
          %p176 = scmp.lt.s32.totalorder %s22, 1
          %s177 = scalar_select %p176, %s22, 1
          %s178 = scalar_lea.vmem %s1, %s177
        $region24: #{tpu_custom_call.1} parent=15 // pred_fallthru
          _
        // Predicated region
        $region25: #{tpu_custom_call.1} parent=15 // pred_check
          %p179 = pneg %p101
        $region26: #{tpu_custom_call.1} parent=15 // pred_check_branch
          %181 = sbr.rel (%p179) target = $region28
        $region27: #{tpu_custom_call.1} parent=15 // pred_region
          %p182 = scmp.lt.s32.totalorder %s22, 1
          %s183 = scalar_select %p182, %s22, 1
          %s184 = scalar_lea.vmem %s2, %s183
        $region28: #{tpu_custom_call.1} parent=15 // pred_fallthru
          _
      $region16: #{tpu_custom_call.1} parent=5 // pred_fallthru
        _
      %p185 = scmp.le.s32.totalorder 1, %s15
      %p186 = scmp.lt.s32.totalorder %s15, 3
      %p187 = pnand %p185, %p186
      %p188 = pneg %p187
      // Predicated region
      $region29: #{tpu_custom_call.1} parent=5 // pred_check
        _
      $region30: #{tpu_custom_call.1} parent=5 // pred_check_branch
        %190 = sbr.rel (%p187) target = $region32
      $region31: #{tpu_custom_call.1} parent=5 // pred_region
        %s191 = ssub.s32 %s15, 1
        %s192 = sand.u32 %s42, 1
        %s193 = scalar_lea.sflag [#allocation3], %s192
        %s194 = sand.u32 %s42, 1
        %s195 = smul.addr %s194, 8
        %s196 = scalar_lea.vmem [#allocation2], %s195
        // Predicated region
        $region33: #{tpu_custom_call.1} parent=31 // pred_check
          %p197 = pneg %p55
        $region34: #{tpu_custom_call.1} parent=31 // pred_check_branch
          %199 = sbr.rel (%p197) target = $region36
        $region35: #{tpu_custom_call.1} parent=31 // pred_region
          %200 = dma.done %s193, 128
        $region36: #{tpu_custom_call.1} parent=31 // pred_fallthru
          _
        %s201 = sand.u32 %s42, 1
        %s202 = scalar_lea.sflag [#allocation3], %s201
        %s203 = sand.u32 %s42, 1
        %s204 = smul.addr %s203, 8
        %s205 = scalar_lea.vmem [#allocation2], %s204
        %p206 = pneg %p55
        %p207 = pneg %p52
        %p208 = scmp.lt.s32.totalorder %s24, 1
        %s209 = scalar_select %p208, %s24, 1
        %s210 = scalar_lea.vmem %s1, %s209
        %p211 = pneg %p81
        %p212 = pneg %p78
        %p213 = scmp.lt.s32.totalorder %s24, 1
        %s214 = scalar_select %p213, %s24, 1
        %s215 = scalar_lea.vmem %s2, %s214
        %p216 = pneg %p107
        %p217 = pneg %p104
        %p218 = pneg %p135
        %p219 = pneg %p132
        %s220 = sand.u32 %s122, 1
        %s221 = scalar_lea.sflag [#allocation4], %s220
        %s222 = sand.u32 %s122, 1
        %s223 = smul.addr %s222, 8
        %s224 = scalar_lea.vmem [#allocation5], %s223
        %p225 = scmp.lt.s32.totalorder %s24, 1
        %s226 = scalar_select %p225, %s24, 1
        %s227 = scalar_lea.vmem %s1, %s226
        %p228 = scmp.lt.s32.totalorder %s24, 1
        %s229 = scalar_select %p228, %s24, 1
        %s230 = scalar_lea.vmem %s2, %s229
        %v231 = vld [vmem:[%s196] sm:$0xff]
        %vm232 = vcmask 261120
        %v233 = vsel %vm232, %v231, 0.0
        %234 = vadd.xlane.f32.xlu0 %v233
        %v235 = vpop.xlane.xlu0 %234
        %v236 = vrcp.pop 32.0
        %v237 = vmul.f32 %v235, %v236
        %v238 = vsub.f32 %v231, %v237
        %v239 = vmul.f32 %v238, %v238
        %v240 = vsel %vm232, %v239, 0.0
        %241 = vadd.xlane.f32.xlu0 %v240
        %v242 = vpop.xlane.xlu0 %241
        %v243 = vrcp.pop 31.0
        %v244 = vmul.f32 %v242, %v243
        %v245 = vrsqrt.pop %v244
        %v246 = vmul.f32 %v244, %v245
        %vm247 = vcmp.eq.f32.partialorder %v244, inf
        %v248 = vsel %vm247, %v244, %v246
        %vm249 = vcmp.eq.f32.partialorder %v244, 0.0
        %v250 = vand.u32 %v244, 2147483648
        %v251 = vsel %vm249, %v250, %v248
        %v252 = vadd.f32 %v251, 1e-06
        %v253 = vrcp.pop %v252
        %v254 = vld [vmem:[%s227] sm:$0x1]
        %v255 = vld [vmem:[%s230] sm:$0x1]
        %v256 = vmul.f32 %v238, %v253
        %v258 = vlaneseq
        %v259 = vshrl.u32 %v258, 7
        %v260 = vsub.s32 0, %v259
        %v261 = vrot.slane %v254, %v260
        %v263 = vmul.f32 %v261, %v256
        %v265 = vlaneseq
        %v266 = vshrl.u32 %v265, 7
        %v267 = vsub.s32 0, %v266
        %v268 = vrot.slane %v255, %v267
        %v270 = vadd.f32 %v263, %v268
        %271 = vst.msk [vmem:[%s224] sm:$0xff] %vm232, %v270
        %s272 = sand.u32 %s122, 1
        %s273 = scalar_lea.sflag [#allocation4], %s272
        %s274 = sand.u32 %s122, 1
        %s275 = smul.addr %s274, 8
        %s276 = scalar_lea.vmem [#allocation5], %s275
        // Predicated region
        $region37: #{tpu_custom_call.1} parent=31 // pred_check
          %p277 = pneg %p132
        $region38: #{tpu_custom_call.1} parent=31 // pred_check_branch
          %279 = sbr.rel (%p277) target = $region40
        $region39: #{tpu_custom_call.1} parent=31 // pred_region
          %s281 = ssub.s32 128, 128
          %282 = vsyncadd %s273, %s281
          %s283 = sadd.s32 %s25, %s24
          %s284 = smul.addr %s283, 128
          %s285 = scalar_lea.hbm %s3, %s284
          %s287 = sshll.u32 %s276, 4
          %s288 = int_to_ptr.vmem [resolvable:$true] %s287
          %290 = dma.vmem_to_hbm [thread:$0]  %s288, 128, %s285, %s273
        $region40: #{tpu_custom_call.1} parent=31 // pred_fallthru
          _
      $region32: #{tpu_custom_call.1} parent=5 // pred_fallthru
        _
      %p291 = scmp.le.s32.totalorder 2, %s15
      // Predicated region
      $region41: #{tpu_custom_call.1} parent=5 // pred_check
        %p292 = pneg %p291
      $region42: #{tpu_custom_call.1} parent=5 // pred_check_branch
        %294 = sbr.rel (%p292) target = $region44
      $region43: #{tpu_custom_call.1} parent=5 // pred_region
        %s295 = ssub.s32 %s15, 2
        // Predicated region
        $region45: #{tpu_custom_call.1} parent=43 // pred_check
          %p296 = pneg %p138
        $region46: #{tpu_custom_call.1} parent=43 // pred_check_branch
          %298 = sbr.rel (%p296) target = $region48
        $region47: #{tpu_custom_call.1} parent=43 // pred_region
          %s299 = sand.u32 %s123, 1
          %s300 = scalar_lea.sflag [#allocation4], %s299
          %s301 = sand.u32 %s123, 1
          %s302 = smul.addr %s301, 8
          %s303 = scalar_lea.vmem [#allocation5], %s302
          %304 = dma.done %s300, 128
        $region48: #{tpu_custom_call.1} parent=43 // pred_fallthru
          _
      $region44: #{tpu_custom_call.1} parent=5 // pred_fallthru
        _
    $region6: #{tpu_custom_call.1} parent=1 // loop_footer
      %s19 = sadd.s32 1, %s15
    $region7: #{tpu_custom_call.1} parent=1 // loop_footer_branch
      %14 = sbr.rel target = $region3
    $region8: #{tpu_custom_call.1} parent=1 // loop_exit
      _
    %305 = vsyncpa [#allocation3], 1
    %s306 = scalar_lea.sflag [#allocation3], 1
    %307 = vsyncpa %s306, 1
    %308 = vsyncpa [#allocation4], 1
    %s309 = scalar_lea.sflag [#allocation4], 1
    %310 = vsyncpa %s309, 1

</llo_original>
